<compile_context>
chip_gen: v7x
topology: tpu7x:2x2x1
jax: 0.10.0
libtpu: 0.0.40
codegen_flags: <defaults>
</compile_context>

<pallas_src>
import jax
import jax.numpy as jnp
from jax.experimental import pallas as pl
from jax.experimental.pallas import tpu as pltpu


def _sublane_multiple(dtype):
    """Minimum sublane multiple for a non-full block of this dtype."""
    itemsize = jnp.dtype(dtype).itemsize
    return max(8, 32 // itemsize)  # f32 -> 8, bf16 -> 16, int8 -> 32


def _pick_num_blocks(nc, dtype, requested):
    """Largest legal block count <= requested along the NC axis."""
    sub = _sublane_multiple(dtype)
    for nb in range(max(requested, 1), 1, -1):
        if nc % nb == 0 and (nc // nb) % sub == 0:
            return nb
    return 1  # single full-extent block is always legal


def _dimension_semantics(num_blocks):
    """CORE_PARALLEL only when the chip really has >=2 TensorCores (v7x)."""
    if num_blocks < 2:
        return ("arbitrary",)
    try:
        info = pltpu.get_tpu_info()
        for attr in ("num_cores", "cores_per_chip", "num_tensorcores",
                     "tensor_cores_per_chip"):
            v = getattr(info, attr, None)
            if isinstance(v, int) and v >= 2:
                return (pltpu.CORE_PARALLEL,)
    except Exception:
        pass
    # Measured: plain "parallel" vs "arbitrary" barely changes codegen; the
    # 2-step grid still gives DMA/compute overlap on single-TC chips.
    return ("arbitrary",)


def broadcast_mul(scale, x, *, num_blocks=2):
    """Computes scale * x where scale is (N, C, 1, 1) and x is (N, C, H, W)."""
    N, C, H, W = x.shape
    assert scale.shape == (N, C, 1, 1)
    NC, HW = N * C, H * W

    nb = _pick_num_blocks(NC, x.dtype, num_blocks)
    block_c = NC // nb

    x2 = x.reshape(NC, HW)                      # contiguous reshape: free
    s2 = scale.reshape(NC, 1).astype(x.dtype)   # contiguous reshape: free

    def kernel(scale_ref, x_ref, o_ref):
        # scale_ref holds the full (NC, 1) column (loaded once via a constant
        # index_map); slice this grid step's rows.  Start is 8-aligned because
        # block_c is sublane-legal whenever nb >= 2 (and 0 when nb == 1).
        start = pl.multiple_of(pl.program_id(0) * block_c, 8)
        s = scale_ref[pl.ds(start, block_c), :]
        o_ref[...] = x_ref[...] * s

    itemsize = jnp.dtype(x.dtype).itemsize
    cost = pl.CostEstimate(
        flops=NC * HW,
        transcendentals=0,
        bytes_accessed=2 * NC * HW * itemsize + NC * itemsize,
    )

    def make_call(dim_sem):
        return pl.pallas_call(
            kernel,
            out_shape=jax.ShapeDtypeStruct((NC, HW), x.dtype),
            grid_spec=pltpu.PrefetchScalarGridSpec(
                num_scalar_prefetch=0,
                grid=(nb,),
                in_specs=[
                    # Full scale column, constant block index -> one DMA total.
                    pl.BlockSpec((NC, 1), lambda i: (0, 0)),
                    pl.BlockSpec((block_c, HW), lambda i: (i, 0)),
                ],
                out_specs=pl.BlockSpec((block_c, HW), lambda i: (i, 0)),
            ),
            compiler_params=pltpu.CompilerParams(dimension_semantics=dim_sem),
            cost_estimate=cost,
        )

    dim_sem = _dimension_semantics(nb)
    try:
        out2 = make_call(dim_sem)(s2, x2)
    except Exception:
        if dim_sem == ("arbitrary",):
            raise
        out2 = make_call(("arbitrary",))(s2, x2)

    return out2.reshape(N, C, H, W)


if __name__ == "__main__":
    # Shapes from the module: x358 = (1, 1056, 14, 14), x363 = (1, 1056, 1, 1)
    key = jax.random.PRNGKey(0)
    k1, k2 = jax.random.split(key)
    x358 = jax.random.normal(k1, (1, 1056, 14, 14), dtype=jnp.float32)
    x363 = jax.random.normal(k2, (1, 1056, 1, 1), dtype=jnp.float32)

    out = broadcast_mul(x363, x358)
    jax.block_until_ready(out)

    # Correctness check against plain-JAX broadcasting semantics (== torch mul)
    ref = x363 * x358
    assert out.shape == (1, 1056, 14, 14)
    assert jnp.allclose(out, ref, atol=1e-6, rtol=1e-6)

    print("KERNEL_OK")
</pallas_src>

<mosaic_0001>
module attributes {stable_mosaic.version = 11 : i64} {
  func.func @kernel(%arg0: i32, %arg1: memref<1056x1xf32, #tpu.memory_space<vmem>>, %arg2: memref<528x196xf32, #tpu.memory_space<vmem>>, %arg3: memref<528x196xf32, #tpu.memory_space<vmem>>) attributes {dimension_semantics = [#tpu.dimension_semantics<arbitrary>], iteration_bounds = array<i64: 2>, scalar_prefetch = 0 : i64, scratch_operands = 0 : i64, tpu.core_type = #tpu.core_type<tc>, window_params = [{pipeline_mode = #tpu.pipeline_mode<synchronous>, transform_indices = @transform_0, window_bounds = array<i64: 1056, 1>}, {transform_indices = @transform_1, window_bounds = array<i64: 528, 196>}, {transform_indices = @transform_2, window_bounds = array<i64: 528, 196>}]} {
    %c528_i32 = arith.constant 528 : i32
    %0 = arith.muli %arg0, %c528_i32 : i32
    %1 = tpu.assume_multiple %0, 8 : i32
    %2 = arith.index_cast %1 : i32 to index
    %c0 = arith.constant 0 : index
    %3 = vector.load %arg1[%2, %c0] : memref<1056x1xf32, #tpu.memory_space<vmem>>, vector<528x1xf32>
    %c0_0 = arith.constant 0 : index
    %c0_1 = arith.constant 0 : index
    %4 = vector.load %arg2[%c0_0, %c0_1] : memref<528x196xf32, #tpu.memory_space<vmem>>, vector<528x196xf32>
    %5 = vector.broadcast %3 : vector<528x1xf32> to vector<528x196xf32>
    %6 = arith.mulf %4, %5 : vector<528x196xf32>
    %c0_2 = arith.constant 0 : index
    %c0_3 = arith.constant 0 : index
    %7 = vector.load %arg3[%c0_2, %c0_3] : memref<528x196xf32, #tpu.memory_space<vmem>>, vector<528x196xf32>
    tpu.vector_store %arg3[%c0_2, %c0_3], %6 {strides = array<i32>} : memref<528x196xf32, #tpu.memory_space<vmem>>, vector<528x196xf32>,
    return
  }
  func.func @transform_0(%arg0: i32) -> (i32, i32) {
    %c0_i32 = arith.constant 0 : i32
    %c0_i32_0 = arith.constant 0 : i32
    %c0_i32_1 = arith.constant 0 : i32
    return %c0_i32, %c0_i32_0 : i32, i32
  }
  func.func @transform_1(%arg0: i32) -> (i32, i32) {
    %c0_i32 = arith.constant 0 : i32
    %c0_i32_0 = arith.constant 0 : i32
    return %arg0, %c0_i32 : i32, i32
  }
  func.func @transform_2(%arg0: i32) -> (i32, i32) {
    %c0_i32 = arith.constant 0 : i32
    %c0_i32_0 = arith.constant 0 : i32
    return %arg0, %c0_i32 : i32, i32
  }
}

</mosaic_0001>

<llo_original>
// kernel: tpu_custom_call.1
$region0: #{tpu_custom_call.1}
  #allocation0 [shape = 'u32[]', space=smem, size = 0x4, offset = 0x4, fixed_abs, tag = 'smem constant byte address 0x4 - core index']
  #allocation1 [shape = 'u32[144,128]{1,0:T(1,128)}', space=vmem, size = 0x12000, scoped, tag = 'internal scratch']
  %s0 = inlined_call_operand.vmem [shape: f32[1056,1], index: 0, kind: input, shape index: {}]
  %s1 = inlined_call_operand.vmem [shape: f32[1056,196], index: 1, kind: input, shape index: {}]
  %s2 = inlined_call_operand.vmem [shape: f32[1056,196], index: 2, kind: output, shape index: {}]
  %s3 = sld [smem:[#allocation0]]
  $region41: #{tpu_custom_call.1} parent=0
    _
  %s5 = ssub.s32 1, %s3
  %s6 = scalar_select 0, %s5, %s3
  loop: start=0, step=1, limit=4
  $region2: #{tpu_custom_call.1} parent=0 // loop_pre_header
    _
  $region3: #{tpu_custom_call.1} parent=0 // loop_header
    %s8 = sphi 0, %s12
    %p9 = scmp.ge.s32.totalorder %s8, 4
    %s16 = sphi 0, %s16
    %s18 = sphi 0, %s16
    %s19 = sphi 0, %s18
    %s33 = sphi 0, %s19
    %s39 = sphi 0, %s41
    %s42 = sphi 0, %s39
    %s43 = sphi 0, %s42
    %s59 = sphi 0, %s43
    %s65 = sphi 0, %s67
    %s68 = sphi 0, %s65
    %s69 = sphi 0, %s68
    %s85 = sphi 0, %s69
  $region4: #{tpu_custom_call.1} parent=0 // loop_header_branch
    %11 = sbr.rel (%p9) target = $region8
  $region5: #{tpu_custom_call.1} parent=0 // loop_body
    %s13 = ssub.s32 %s8, 1
    %s14 = ssub.s32 %s8, 2
    %s15 = sadd.s32 %s8, 1
    %s17 = sadd.s32 %s16, 1
    %p20 = scmp.eq.s32.totalorder %s8, 1
    %p21 = scmp.ne.s32.totalorder %s16, %s18
    %p22 = scmp.eq.s32.totalorder %s8, 0
    %p23 = por %p21, %p22
    %p24 = scmp.ne.s32.totalorder %s16, %s18
    %p25 = scmp.eq.s32.totalorder %s13, 1
    %p26 = por %p24, %p25
    %p27 = scmp.ne.s32.totalorder %s18, %s19
    %p28 = scmp.eq.s32.totalorder %s13, 0
    %p29 = por %p27, %p28
    %p30 = scmp.ne.s32.totalorder %s18, %s19
    %p31 = scmp.eq.s32.totalorder %s14, 1
    %p32 = por %p30, %p31
    %p34 = scmp.ne.s32.totalorder %s19, %s33
    %p35 = scmp.eq.s32.totalorder %s14, 0
    %p36 = por %p34, %p35
    %s37 = ssub.s32 %s8, %s15
    %p38 = scmp.eq.s32.totalorder %s37, 0
    %s40 = sadd.s32 %s39, 1
    %s41 = scalar_select %p38, %s39, %s40
    %p44 = pneg %p38
    %p45 = scmp.eq.s32.totalorder %s8, 1
    %p46 = por %p44, %p45
    %p47 = scmp.ne.s32.totalorder %s39, %s42
    %p48 = scmp.eq.s32.totalorder %s8, 0
    %p49 = por %p47, %p48
    %p50 = scmp.ne.s32.totalorder %s39, %s42
    %p51 = scmp.eq.s32.totalorder %s13, 1
    %p52 = por %p50, %p51
    %p53 = scmp.ne.s32.totalorder %s42, %s43
    %p54 = scmp.eq.s32.totalorder %s13, 0
    %p55 = por %p53, %p54
    %p56 = scmp.ne.s32.totalorder %s42, %s43
    %p57 = scmp.eq.s32.totalorder %s14, 1
    %p58 = por %p56, %p57
    %p60 = scmp.ne.s32.totalorder %s43, %s59
    %p61 = scmp.eq.s32.totalorder %s14, 0
    %p62 = por %p60, %p61
    %s63 = ssub.s32 %s8, %s15
    %p64 = scmp.eq.s32.totalorder %s63, 0
    %s66 = sadd.s32 %s65, 1
    %s67 = scalar_select %p64, %s65, %s66
    %p70 = pneg %p64
    %p71 = scmp.eq.s32.totalorder %s8, 1
    %p72 = por %p70, %p71
    %p73 = scmp.ne.s32.totalorder %s65, %s68
    %p74 = scmp.eq.s32.totalorder %s8, 0
    %p75 = por %p73, %p74
    %p76 = scmp.ne.s32.totalorder %s65, %s68
    %p77 = scmp.eq.s32.totalorder %s13, 1
    %p78 = por %p76, %p77
    %p79 = scmp.ne.s32.totalorder %s68, %s69
    %p80 = scmp.eq.s32.totalorder %s13, 0
    %p81 = por %p79, %p80
    %p82 = scmp.ne.s32.totalorder %s68, %s69
    %p83 = scmp.eq.s32.totalorder %s14, 1
    %p84 = por %p82, %p83
    %p86 = scmp.ne.s32.totalorder %s69, %s85
    %p87 = scmp.eq.s32.totalorder %s14, 0
    %p88 = por %p86, %p87
    %p89 = scmp.le.s32.totalorder 1, %s8
    %p90 = scmp.lt.s32.totalorder %s8, 3
    %p91 = pnand %p89, %p90
    %p92 = pneg %p91
    // Predicated region
    $region9: #{tpu_custom_call.1} parent=5 // pred_check
      _
    $region10: #{tpu_custom_call.1} parent=5 // pred_check_branch
      %94 = sbr.rel (%p91) target = $region12
    $region11: #{tpu_custom_call.1} parent=5 // pred_region
      %s95 = ssub.s32 %s8, 1
      // Predicated region
      $region13: #{tpu_custom_call.1} parent=11 // pred_check
        %p96 = pneg %p29
      $region14: #{tpu_custom_call.1} parent=11 // pred_check_branch
        %98 = sbr.rel (%p96) target = $region16
      $region15: #{tpu_custom_call.1} parent=11 // pred_region
        _
      $region16: #{tpu_custom_call.1} parent=11 // pred_fallthru
        _
    $region12: #{tpu_custom_call.1} parent=5 // pred_fallthru
      _
    %p99 = scmp.lt.s32.totalorder %s8, 2
    // Predicated region
    $region17: #{tpu_custom_call.1} parent=5 // pred_check
      %p100 = pneg %p99
    $region18: #{tpu_custom_call.1} parent=5 // pred_check_branch
      %102 = sbr.rel (%p100) target = $region20
    $region19: #{tpu_custom_call.1} parent=5 // pred_region
      // Predicated region
      $region21: #{tpu_custom_call.1} parent=19 // pred_check
        %p103 = pneg %p49
      $region22: #{tpu_custom_call.1} parent=19 // pred_check_branch
        %105 = sbr.rel (%p103) target = $region24
      $region23: #{tpu_custom_call.1} parent=19 // pred_region
        %s106 = smul.u32 66, %s8
        %p107 = scmp.lt.s32.totalorder %s106, 131
        %s108 = scalar_select %p107, %s106, 131
        %s109 = smul.addr %s108, 2
        %s110 = smul.addr %s109, 8
        %s111 = scalar_lea.vmem %s1, %s110
        %s112 = smul.u32 66, %s8
      $region24: #{tpu_custom_call.1} parent=19 // pred_fallthru
        _
    $region20: #{tpu_custom_call.1} parent=5 // pred_fallthru
      _
    %p113 = scmp.le.s32.totalorder 1, %s8
    %p114 = scmp.lt.s32.totalorder %s8, 3
    %p115 = pnand %p113, %p114
    %p116 = pneg %p115
    // Predicated region
    $region25: #{tpu_custom_call.1} parent=5 // pred_check
      _
    $region26: #{tpu_custom_call.1} parent=5 // pred_check_branch
      %118 = sbr.rel (%p115) target = $region28
    $region27: #{tpu_custom_call.1} parent=5 // pred_region
      %s119 = ssub.s32 %s8, 1
      %p120 = pneg %p29
      %p121 = pneg %p26
      %s122 = smul.u32 66, %s13
      %p123 = scmp.lt.s32.totalorder %s122, 131
      %s124 = scalar_select %p123, %s122, 131
      %s125 = smul.addr %s124, 2
      %s126 = smul.addr %s125, 8
      %s127 = scalar_lea.vmem %s1, %s126
      %p128 = pneg %p55
      %p129 = pneg %p52
      %p130 = pneg %p81
      %p131 = pneg %p78
      %s132 = smul.u32 66, %s13
      %p133 = scmp.lt.s32.totalorder %s132, 131
      %s134 = scalar_select %p133, %s132, 131
      %s135 = smul.addr %s134, 2
      %s136 = smul.addr %s135, 8
      %s137 = scalar_lea.vmem %s2, %s136
      %s138 = smul.u32 66, %s13
      %p139 = scmp.lt.s32.totalorder %s138, 131
      %s140 = scalar_select %p139, %s138, 131
      %s141 = smul.addr %s140, 2
      %s142 = smul.addr %s141, 8
      %s143 = scalar_lea.vmem %s1, %s142
      %s144 = smul.u32 66, %s13
      %s145 = smul.u32 66, %s13
      %p146 = scmp.lt.s32.totalorder %s145, 131
      %s147 = scalar_select %p146, %s145, 131
      %s148 = smul.addr %s147, 2
      %s149 = smul.addr %s148, 8
      %s150 = scalar_lea.vmem %s2, %s149
      %s151 = smul.u32 66, %s13
      %s152 = smul.u32 %s13, 528
      %s153 = scalar_lea.vmem %s0, %s152
      %v154 = vld [vmem:[%s153] sm:$0xff]
      %v155 = vld [vmem:[%s153 + $0x8] sm:$0xff]
      %v156 = vld [vmem:[%s153 + $0x10] sm:$0xff]
      %v157 = vld [vmem:[%s153 + $0x18] sm:$0xff]
      %v158 = vld [vmem:[%s153 + $0x20] sm:$0xff]
      %v159 = vld [vmem:[%s153 + $0x28] sm:$0xff]
      %v160 = vld [vmem:[%s153 + $0x30] sm:$0xff]
      %v161 = vld [vmem:[%s153 + $0x38] sm:$0xff]
      %v162 = vld [vmem:[%s153 + $0x40] sm:$0xff]
      %v163 = vld [vmem:[%s153 + $0x48] sm:$0xff]
      %v164 = vld [vmem:[%s153 + $0x50] sm:$0xff]
      %v165 = vld [vmem:[%s153 + $0x58] sm:$0xff]
      %v166 = vld [vmem:[%s153 + $0x60] sm:$0xff]
      %v167 = vld [vmem:[%s153 + $0x68] sm:$0xff]
      %v168 = vld [vmem:[%s153 + $0x70] sm:$0xff]
      %v169 = vld [vmem:[%s153 + $0x78] sm:$0xff]
      %v170 = vld [vmem:[%s153 + $0x80] sm:$0xff]
      %v171 = vld [vmem:[%s153 + $0x88] sm:$0xff]
      %v172 = vld [vmem:[%s153 + $0x90] sm:$0xff]
      %v173 = vld [vmem:[%s153 + $0x98] sm:$0xff]
      %v174 = vld [vmem:[%s153 + $0xa0] sm:$0xff]
      %v175 = vld [vmem:[%s153 + $0xa8] sm:$0xff]
      %v176 = vld [vmem:[%s153 + $0xb0] sm:$0xff]
      %v177 = vld [vmem:[%s153 + $0xb8] sm:$0xff]
      %v178 = vld [vmem:[%s153 + $0xc0] sm:$0xff]
      %v179 = vld [vmem:[%s153 + $0xc8] sm:$0xff]
      %v180 = vld [vmem:[%s153 + $0xd0] sm:$0xff]
      %v181 = vld [vmem:[%s153 + $0xd8] sm:$0xff]
      %v182 = vld [vmem:[%s153 + $0xe0] sm:$0xff]
      %v183 = vld [vmem:[%s153 + $0xe8] sm:$0xff]
      %v184 = vld [vmem:[%s153 + $0xf0] sm:$0xff]
      %v185 = vld [vmem:[%s153 + $0xf8] sm:$0xff]
      %v186 = vld [vmem:[%s153 + $0x100] sm:$0xff]
      %v187 = vld [vmem:[%s153 + $0x108] sm:$0xff]
      %v188 = vld [vmem:[%s153 + $0x110] sm:$0xff]
      %v189 = vld [vmem:[%s153 + $0x118] sm:$0xff]
      %v190 = vld [vmem:[%s153 + $0x120] sm:$0xff]
      %v191 = vld [vmem:[%s153 + $0x128] sm:$0xff]
      %v192 = vld [vmem:[%s153 + $0x130] sm:$0xff]
      %v193 = vld [vmem:[%s153 + $0x138] sm:$0xff]
      %v194 = vld [vmem:[%s153 + $0x140] sm:$0xff]
      %v195 = vld [vmem:[%s153 + $0x148] sm:$0xff]
      %v196 = vld [vmem:[%s153 + $0x150] sm:$0xff]
      %v197 = vld [vmem:[%s153 + $0x158] sm:$0xff]
      %v198 = vld [vmem:[%s153 + $0x160] sm:$0xff]
      %v199 = vld [vmem:[%s153 + $0x168] sm:$0xff]
      %v200 = vld [vmem:[%s153 + $0x170] sm:$0xff]
      %v201 = vld [vmem:[%s153 + $0x178] sm:$0xff]
      %v202 = vld [vmem:[%s153 + $0x180] sm:$0xff]
      %v203 = vld [vmem:[%s153 + $0x188] sm:$0xff]
      %v204 = vld [vmem:[%s153 + $0x190] sm:$0xff]
      %v205 = vld [vmem:[%s153 + $0x198] sm:$0xff]
      %v206 = vld [vmem:[%s153 + $0x1a0] sm:$0xff]
      %v207 = vld [vmem:[%s153 + $0x1a8] sm:$0xff]
      %v208 = vld [vmem:[%s153 + $0x1b0] sm:$0xff]
      %v209 = vld [vmem:[%s153 + $0x1b8] sm:$0xff]
      %v210 = vld [vmem:[%s153 + $0x1c0] sm:$0xff]
      %v211 = vld [vmem:[%s153 + $0x1c8] sm:$0xff]
      %v212 = vld [vmem:[%s153 + $0x1d0] sm:$0xff]
      %v213 = vld [vmem:[%s153 + $0x1d8] sm:$0xff]
      %v214 = vld [vmem:[%s153 + $0x1e0] sm:$0xff]
      %v215 = vld [vmem:[%s153 + $0x1e8] sm:$0xff]
      %v216 = vld [vmem:[%s153 + $0x1f0] sm:$0xff]
      %v217 = vld [vmem:[%s153 + $0x1f8] sm:$0xff]
      %v218 = vld [vmem:[%s153 + $0x200] sm:$0xff]
      %v219 = vld [vmem:[%s153 + $0x208] sm:$0xff]
      %v220 = vld [vmem:[%s143] sm:$0xff]
      %v221 = vld [vmem:[%s143 + $0x8] sm:$0xff]
      %v222 = vld [vmem:[%s143 + $0x10] sm:$0xff]
      %v223 = vld [vmem:[%s143 + $0x18] sm:$0xff]
      %v224 = vld [vmem:[%s143 + $0x20] sm:$0xff]
      %v225 = vld [vmem:[%s143 + $0x28] sm:$0xff]
      %v226 = vld [vmem:[%s143 + $0x30] sm:$0xff]
      %v227 = vld [vmem:[%s143 + $0x38] sm:$0xff]
      %v228 = vld [vmem:[%s143 + $0x40] sm:$0xff]
      %v229 = vld [vmem:[%s143 + $0x48] sm:$0xff]
      %v230 = vld [vmem:[%s143 + $0x50] sm:$0xff]
      %v231 = vld [vmem:[%s143 + $0x58] sm:$0xff]
      %v232 = vld [vmem:[%s143 + $0x60] sm:$0xff]
      %v233 = vld [vmem:[%s143 + $0x68] sm:$0xff]
      %v234 = vld [vmem:[%s143 + $0x70] sm:$0xff]
      %v235 = vld [vmem:[%s143 + $0x78] sm:$0xff]
      %v236 = vld [vmem:[%s143 + $0x80] sm:$0xff]
      %v237 = vld [vmem:[%s143 + $0x88] sm:$0xff]
      %v238 = vld [vmem:[%s143 + $0x90] sm:$0xff]
      %v239 = vld [vmem:[%s143 + $0x98] sm:$0xff]
      %v240 = vld [vmem:[%s143 + $0xa0] sm:$0xff]
      %v241 = vld [vmem:[%s143 + $0xa8] sm:$0xff]
      %v242 = vld [vmem:[%s143 + $0xb0] sm:$0xff]
      %v243 = vld [vmem:[%s143 + $0xb8] sm:$0xff]
      %v244 = vld [vmem:[%s143 + $0xc0] sm:$0xff]
      %v245 = vld [vmem:[%s143 + $0xc8] sm:$0xff]
      %v246 = vld [vmem:[%s143 + $0xd0] sm:$0xff]
      %v247 = vld [vmem:[%s143 + $0xd8] sm:$0xff]
      %v248 = vld [vmem:[%s143 + $0xe0] sm:$0xff]
      %v249 = vld [vmem:[%s143 + $0xe8] sm:$0xff]
      %v250 = vld [vmem:[%s143 + $0xf0] sm:$0xff]
      %v251 = vld [vmem:[%s143 + $0xf8] sm:$0xff]
      %v252 = vld [vmem:[%s143 + $0x100] sm:$0xff]
      %v253 = vld [vmem:[%s143 + $0x108] sm:$0xff]
      %v254 = vld [vmem:[%s143 + $0x110] sm:$0xff]
      %v255 = vld [vmem:[%s143 + $0x118] sm:$0xff]
      %v256 = vld [vmem:[%s143 + $0x120] sm:$0xff]
      %v257 = vld [vmem:[%s143 + $0x128] sm:$0xff]
      %v258 = vld [vmem:[%s143 + $0x130] sm:$0xff]
      %v259 = vld [vmem:[%s143 + $0x138] sm:$0xff]
      %v260 = vld [vmem:[%s143 + $0x140] sm:$0xff]
      %v261 = vld [vmem:[%s143 + $0x148] sm:$0xff]
      %v262 = vld [vmem:[%s143 + $0x150] sm:$0xff]
      %v263 = vld [vmem:[%s143 + $0x158] sm:$0xff]
      %v264 = vld [vmem:[%s143 + $0x160] sm:$0xff]
      %v265 = vld [vmem:[%s143 + $0x168] sm:$0xff]
      %v266 = vld [vmem:[%s143 + $0x170] sm:$0xff]
      %v267 = vld [vmem:[%s143 + $0x178] sm:$0xff]
      %v268 = vld [vmem:[%s143 + $0x180] sm:$0xff]
      %v269 = vld [vmem:[%s143 + $0x188] sm:$0xff]
      %v270 = vld [vmem:[%s143 + $0x190] sm:$0xff]
      %v271 = vld [vmem:[%s143 + $0x198] sm:$0xff]
      %v272 = vld [vmem:[%s143 + $0x1a0] sm:$0xff]
      %v273 = vld [vmem:[%s143 + $0x1a8] sm:$0xff]
      %v274 = vld [vmem:[%s143 + $0x1b0] sm:$0xff]
      %v275 = vld [vmem:[%s143 + $0x1b8] sm:$0xff]
      %v276 = vld [vmem:[%s143 + $0x1c0] sm:$0xff]
      %v277 = vld [vmem:[%s143 + $0x1c8] sm:$0xff]
      %v278 = vld [vmem:[%s143 + $0x1d0] sm:$0xff]
      %v279 = vld [vmem:[%s143 + $0x1d8] sm:$0xff]
      %v280 = vld [vmem:[%s143 + $0x1e0] sm:$0xff]
      %v281 = vld [vmem:[%s143 + $0x1e8] sm:$0xff]
      %v282 = vld [vmem:[%s143 + $0x1f0] sm:$0xff]
      %v283 = vld [vmem:[%s143 + $0x1f8] sm:$0xff]
      %v284 = vld [vmem:[%s143 + $0x200] sm:$0xff]
      %v285 = vld [vmem:[%s143 + $0x208] sm:$0xff]
      %v286 = vld [vmem:[%s143 + $0x210] sm:$0xff]
      %v287 = vld [vmem:[%s143 + $0x218] sm:$0xff]
      %v288 = vld [vmem:[%s143 + $0x220] sm:$0xff]
      %v289 = vld [vmem:[%s143 + $0x228] sm:$0xff]
      %v290 = vld [vmem:[%s143 + $0x230] sm:$0xff]
      %v291 = vld [vmem:[%s143 + $0x238] sm:$0xff]
      %v292 = vld [vmem:[%s143 + $0x240] sm:$0xff]
      %v293 = vld [vmem:[%s143 + $0x248] sm:$0xff]
      %v294 = vld [vmem:[%s143 + $0x250] sm:$0xff]
      %v295 = vld [vmem:[%s143 + $0x258] sm:$0xff]
      %v296 = vld [vmem:[%s143 + $0x260] sm:$0xff]
      %v297 = vld [vmem:[%s143 + $0x268] sm:$0xff]
      %v298 = vld [vmem:[%s143 + $0x270] sm:$0xff]
      %v299 = vld [vmem:[%s143 + $0x278] sm:$0xff]
      %v300 = vld [vmem:[%s143 + $0x280] sm:$0xff]
      %v301 = vld [vmem:[%s143 + $0x288] sm:$0xff]
      %v302 = vld [vmem:[%s143 + $0x290] sm:$0xff]
      %v303 = vld [vmem:[%s143 + $0x298] sm:$0xff]
      %v304 = vld [vmem:[%s143 + $0x2a0] sm:$0xff]
      %v305 = vld [vmem:[%s143 + $0x2a8] sm:$0xff]
      %v306 = vld [vmem:[%s143 + $0x2b0] sm:$0xff]
      %v307 = vld [vmem:[%s143 + $0x2b8] sm:$0xff]
      %v308 = vld [vmem:[%s143 + $0x2c0] sm:$0xff]
      %v309 = vld [vmem:[%s143 + $0x2c8] sm:$0xff]
      %v310 = vld [vmem:[%s143 + $0x2d0] sm:$0xff]
      %v311 = vld [vmem:[%s143 + $0x2d8] sm:$0xff]
      %v312 = vld [vmem:[%s143 + $0x2e0] sm:$0xff]
      %v313 = vld [vmem:[%s143 + $0x2e8] sm:$0xff]
      %v314 = vld [vmem:[%s143 + $0x2f0] sm:$0xff]
      %v315 = vld [vmem:[%s143 + $0x2f8] sm:$0xff]
      %v316 = vld [vmem:[%s143 + $0x300] sm:$0xff]
      %v317 = vld [vmem:[%s143 + $0x308] sm:$0xff]
      %v318 = vld [vmem:[%s143 + $0x310] sm:$0xff]
      %v319 = vld [vmem:[%s143 + $0x318] sm:$0xff]
      %v320 = vld [vmem:[%s143 + $0x320] sm:$0xff]
      %v321 = vld [vmem:[%s143 + $0x328] sm:$0xff]
      %v322 = vld [vmem:[%s143 + $0x330] sm:$0xff]
      %v323 = vld [vmem:[%s143 + $0x338] sm:$0xff]
      %v324 = vld [vmem:[%s143 + $0x340] sm:$0xff]
      %v325 = vld [vmem:[%s143 + $0x348] sm:$0xff]
      %v326 = vld [vmem:[%s143 + $0x350] sm:$0xff]
      %v327 = vld [vmem:[%s143 + $0x358] sm:$0xff]
      %v328 = vld [vmem:[%s143 + $0x360] sm:$0xff]
      %v329 = vld [vmem:[%s143 + $0x368] sm:$0xff]
      %v330 = vld [vmem:[%s143 + $0x370] sm:$0xff]
      %v331 = vld [vmem:[%s143 + $0x378] sm:$0xff]
      %v332 = vld [vmem:[%s143 + $0x380] sm:$0xff]
      %v333 = vld [vmem:[%s143 + $0x388] sm:$0xff]
      %v334 = vld [vmem:[%s143 + $0x390] sm:$0xff]
      %v335 = vld [vmem:[%s143 + $0x398] sm:$0xff]
      %v336 = vld [vmem:[%s143 + $0x3a0] sm:$0xff]
      %v337 = vld [vmem:[%s143 + $0x3a8] sm:$0xff]
      %v338 = vld [vmem:[%s143 + $0x3b0] sm:$0xff]
      %v339 = vld [vmem:[%s143 + $0x3b8] sm:$0xff]
      %v340 = vld [vmem:[%s143 + $0x3c0] sm:$0xff]
      %v341 = vld [vmem:[%s143 + $0x3c8] sm:$0xff]
      %v342 = vld [vmem:[%s143 + $0x3d0] sm:$0xff]
      %v343 = vld [vmem:[%s143 + $0x3d8] sm:$0xff]
      %v344 = vld [vmem:[%s143 + $0x3e0] sm:$0xff]
      %v345 = vld [vmem:[%s143 + $0x3e8] sm:$0xff]
      %v346 = vld [vmem:[%s143 + $0x3f0] sm:$0xff]
      %v347 = vld [vmem:[%s143 + $0x3f8] sm:$0xff]
      %v348 = vld [vmem:[%s143 + $0x400] sm:$0xff]
      %v349 = vld [vmem:[%s143 + $0x408] sm:$0xff]
      %v350 = vld [vmem:[%s143 + $0x410] sm:$0xff]
      %v351 = vld [vmem:[%s143 + $0x418] sm:$0xff]
      %353 = vset.pattern.permute.xlu0 0
      %354 = vperm.xlu0 %353, %v154
      %v355 = vpop.permute.xlu0 %354
      %358 = vset.pattern.permute.xlu0 0
      %359 = vperm.xlu0 %358, %v155
      %v360 = vpop.permute.xlu0 %359
      %363 = vset.pattern.permute.xlu0 0
      %364 = vperm.xlu0 %363, %v156
      %v365 = vpop.permute.xlu0 %364
      %368 = vset.pattern.permute.xlu0 0
      %369 = vperm.xlu0 %368, %v157
      %v370 = vpop.permute.xlu0 %369
      %373 = vset.pattern.permute.xlu0 0
      %374 = vperm.xlu0 %373, %v158
      %v375 = vpop.permute.xlu0 %374
      %378 = vset.pattern.permute.xlu0 0
      %379 = vperm.xlu0 %378, %v159
      %v380 = vpop.permute.xlu0 %379
      %383 = vset.pattern.permute.xlu0 0
      %384 = vperm.xlu0 %383, %v160
      %v385 = vpop.permute.xlu0 %384
      %388 = vset.pattern.permute.xlu0 0
      %389 = vperm.xlu0 %388, %v161
      %v390 = vpop.permute.xlu0 %389
      %393 = vset.pattern.permute.xlu0 0
      %394 = vperm.xlu0 %393, %v162
      %v395 = vpop.permute.xlu0 %394
      %398 = vset.pattern.permute.xlu0 0
      %399 = vperm.xlu0 %398, %v163
      %v400 = vpop.permute.xlu0 %399
      %403 = vset.pattern.permute.xlu0 0
      %404 = vperm.xlu0 %403, %v164
      %v405 = vpop.permute.xlu0 %404
      %408 = vset.pattern.permute.xlu0 0
      %409 = vperm.xlu0 %408, %v165
      %v410 = vpop.permute.xlu0 %409
      %413 = vset.pattern.permute.xlu0 0
      %414 = vperm.xlu0 %413, %v166
      %v415 = vpop.permute.xlu0 %414
      %418 = vset.pattern.permute.xlu0 0
      %419 = vperm.xlu0 %418, %v167
      %v420 = vpop.permute.xlu0 %419
      %423 = vset.pattern.permute.xlu0 0
      %424 = vperm.xlu0 %423, %v168
      %v425 = vpop.permute.xlu0 %424
      %428 = vset.pattern.permute.xlu0 0
      %429 = vperm.xlu0 %428, %v169
      %v430 = vpop.permute.xlu0 %429
      %433 = vset.pattern.permute.xlu0 0
      %434 = vperm.xlu0 %433, %v170
      %v435 = vpop.permute.xlu0 %434
      %438 = vset.pattern.permute.xlu0 0
      %439 = vperm.xlu0 %438, %v171
      %v440 = vpop.permute.xlu0 %439
      %443 = vset.pattern.permute.xlu0 0
      %444 = vperm.xlu0 %443, %v172
      %v445 = vpop.permute.xlu0 %444
      %448 = vset.pattern.permute.xlu0 0
      %449 = vperm.xlu0 %448, %v173
      %v450 = vpop.permute.xlu0 %449
      %453 = vset.pattern.permute.xlu0 0
      %454 = vperm.xlu0 %453, %v174
      %v455 = vpop.permute.xlu0 %454
      %458 = vset.pattern.permute.xlu0 0
      %459 = vperm.xlu0 %458, %v175
      %v460 = vpop.permute.xlu0 %459
      %463 = vset.pattern.permute.xlu0 0
      %464 = vperm.xlu0 %463, %v176
      %v465 = vpop.permute.xlu0 %464
      %468 = vset.pattern.permute.xlu0 0
      %469 = vperm.xlu0 %468, %v177
      %v470 = vpop.permute.xlu0 %469
      %473 = vset.pattern.permute.xlu0 0
      %474 = vperm.xlu0 %473, %v178
      %v475 = vpop.permute.xlu0 %474
      %478 = vset.pattern.permute.xlu0 0
      %479 = vperm.xlu0 %478, %v179
      %v480 = vpop.permute.xlu0 %479
      %483 = vset.pattern.permute.xlu0 0
      %484 = vperm.xlu0 %483, %v180
      %v485 = vpop.permute.xlu0 %484
      %488 = vset.pattern.permute.xlu0 0
      %489 = vperm.xlu0 %488, %v181
      %v490 = vpop.permute.xlu0 %489
      %493 = vset.pattern.permute.xlu0 0
      %494 = vperm.xlu0 %493, %v182
      %v495 = vpop.permute.xlu0 %494
      %498 = vset.pattern.permute.xlu0 0
      %499 = vperm.xlu0 %498, %v183
      %v500 = vpop.permute.xlu0 %499
      %503 = vset.pattern.permute.xlu0 0
      %504 = vperm.xlu0 %503, %v184
      %v505 = vpop.permute.xlu0 %504
      %508 = vset.pattern.permute.xlu0 0
      %509 = vperm.xlu0 %508, %v185
      %v510 = vpop.permute.xlu0 %509
      %513 = vset.pattern.permute.xlu0 0
      %514 = vperm.xlu0 %513, %v186
      %v515 = vpop.permute.xlu0 %514
      %518 = vset.pattern.permute.xlu0 0
      %519 = vperm.xlu0 %518, %v187
      %v520 = vpop.permute.xlu0 %519
      %523 = vset.pattern.permute.xlu0 0
      %524 = vperm.xlu0 %523, %v188
      %v525 = vpop.permute.xlu0 %524
      %528 = vset.pattern.permute.xlu0 0
      %529 = vperm.xlu0 %528, %v189
      %v530 = vpop.permute.xlu0 %529
      %533 = vset.pattern.permute.xlu0 0
      %534 = vperm.xlu0 %533, %v190
      %v535 = vpop.permute.xlu0 %534
      %538 = vset.pattern.permute.xlu0 0
      %539 = vperm.xlu0 %538, %v191
      %v540 = vpop.permute.xlu0 %539
      %543 = vset.pattern.permute.xlu0 0
      %544 = vperm.xlu0 %543, %v192
      %v545 = vpop.permute.xlu0 %544
      %548 = vset.pattern.permute.xlu0 0
      %549 = vperm.xlu0 %548, %v193
      %v550 = vpop.permute.xlu0 %549
      %553 = vset.pattern.permute.xlu0 0
      %554 = vperm.xlu0 %553, %v194
      %v555 = vpop.permute.xlu0 %554
      %558 = vset.pattern.permute.xlu0 0
      %559 = vperm.xlu0 %558, %v195
      %v560 = vpop.permute.xlu0 %559
      %563 = vset.pattern.permute.xlu0 0
      %564 = vperm.xlu0 %563, %v196
      %v565 = vpop.permute.xlu0 %564
      %568 = vset.pattern.permute.xlu0 0
      %569 = vperm.xlu0 %568, %v197
      %v570 = vpop.permute.xlu0 %569
      %573 = vset.pattern.permute.xlu0 0
      %574 = vperm.xlu0 %573, %v198
      %v575 = vpop.permute.xlu0 %574
      %578 = vset.pattern.permute.xlu0 0
      %579 = vperm.xlu0 %578, %v199
      %v580 = vpop.permute.xlu0 %579
      %583 = vset.pattern.permute.xlu0 0
      %584 = vperm.xlu0 %583, %v200
      %v585 = vpop.permute.xlu0 %584
      %588 = vset.pattern.permute.xlu0 0
      %589 = vperm.xlu0 %588, %v201
      %v590 = vpop.permute.xlu0 %589
      %593 = vset.pattern.permute.xlu0 0
      %594 = vperm.xlu0 %593, %v202
      %v595 = vpop.permute.xlu0 %594
      %598 = vset.pattern.permute.xlu0 0
      %599 = vperm.xlu0 %598, %v203
      %v600 = vpop.permute.xlu0 %599
      %603 = vset.pattern.permute.xlu0 0
      %604 = vperm.xlu0 %603, %v204
      %v605 = vpop.permute.xlu0 %604
      %608 = vset.pattern.permute.xlu0 0
      %609 = vperm.xlu0 %608, %v205
      %v610 = vpop.permute.xlu0 %609
      %613 = vset.pattern.permute.xlu0 0
      %614 = vperm.xlu0 %613, %v206
      %v615 = vpop.permute.xlu0 %614
      %618 = vset.pattern.permute.xlu0 0
      %619 = vperm.xlu0 %618, %v207
      %v620 = vpop.permute.xlu0 %619
      %623 = vset.pattern.permute.xlu0 0
      %624 = vperm.xlu0 %623, %v208
      %v625 = vpop.permute.xlu0 %624
      %628 = vset.pattern.permute.xlu0 0
      %629 = vperm.xlu0 %628, %v209
      %v630 = vpop.permute.xlu0 %629
      %633 = vset.pattern.permute.xlu0 0
      %634 = vperm.xlu0 %633, %v210
      %v635 = vpop.permute.xlu0 %634
      %638 = vset.pattern.permute.xlu0 0
      %639 = vperm.xlu0 %638, %v211
      %v640 = vpop.permute.xlu0 %639
      %643 = vset.pattern.permute.xlu0 0
      %644 = vperm.xlu0 %643, %v212
      %v645 = vpop.permute.xlu0 %644
      %648 = vset.pattern.permute.xlu0 0
      %649 = vperm.xlu0 %648, %v213
      %v650 = vpop.permute.xlu0 %649
      %653 = vset.pattern.permute.xlu0 0
      %654 = vperm.xlu0 %653, %v214
      %v655 = vpop.permute.xlu0 %654
      %658 = vset.pattern.permute.xlu0 0
      %659 = vperm.xlu0 %658, %v215
      %v660 = vpop.permute.xlu0 %659
      %663 = vset.pattern.permute.xlu0 0
      %664 = vperm.xlu0 %663, %v216
      %v665 = vpop.permute.xlu0 %664
      %668 = vset.pattern.permute.xlu0 0
      %669 = vperm.xlu0 %668, %v217
      %v670 = vpop.permute.xlu0 %669
      %673 = vset.pattern.permute.xlu0 0
      %674 = vperm.xlu0 %673, %v218
      %v675 = vpop.permute.xlu0 %674
      %678 = vset.pattern.permute.xlu0 0
      %679 = vperm.xlu0 %678, %v219
      %v680 = vpop.permute.xlu0 %679
      %v682 = vmul.f32 %v220, %v355
      %v683 = vmul.f32 %v221, %v355
      %v684 = vmul.f32 %v222, %v360
      %v685 = vmul.f32 %v223, %v360
      %v686 = vmul.f32 %v224, %v365
      %v687 = vmul.f32 %v225, %v365
      %v688 = vmul.f32 %v226, %v370
      %v689 = vmul.f32 %v227, %v370
      %v690 = vmul.f32 %v228, %v375
      %v691 = vmul.f32 %v229, %v375
      %v692 = vmul.f32 %v230, %v380
      %v693 = vmul.f32 %v231, %v380
      %v694 = vmul.f32 %v232, %v385
      %v695 = vmul.f32 %v233, %v385
      %v696 = vmul.f32 %v234, %v390
      %v697 = vmul.f32 %v235, %v390
      %v698 = vmul.f32 %v236, %v395
      %v699 = vmul.f32 %v237, %v395
      %v700 = vmul.f32 %v238, %v400
      %v701 = vmul.f32 %v239, %v400
      %v702 = vmul.f32 %v240, %v405
      %v703 = vmul.f32 %v241, %v405
      %v704 = vmul.f32 %v242, %v410
      %v705 = vmul.f32 %v243, %v410
      %v706 = vmul.f32 %v244, %v415
      %v707 = vmul.f32 %v245, %v415
      %v708 = vmul.f32 %v246, %v420
      %v709 = vmul.f32 %v247, %v420
      %v710 = vmul.f32 %v248, %v425
      %v711 = vmul.f32 %v249, %v425
      %v712 = vmul.f32 %v250, %v430
      %v713 = vmul.f32 %v251, %v430
      %v714 = vmul.f32 %v252, %v435
      %v715 = vmul.f32 %v253, %v435
      %v716 = vmul.f32 %v254, %v440
      %v717 = vmul.f32 %v255, %v440
      %v718 = vmul.f32 %v256, %v445
      %v719 = vmul.f32 %v257, %v445
      %v720 = vmul.f32 %v258, %v450
      %v721 = vmul.f32 %v259, %v450
      %v722 = vmul.f32 %v260, %v455
      %v723 = vmul.f32 %v261, %v455
      %v724 = vmul.f32 %v262, %v460
      %v725 = vmul.f32 %v263, %v460
      %v726 = vmul.f32 %v264, %v465
      %v727 = vmul.f32 %v265, %v465
      %v728 = vmul.f32 %v266, %v470
      %v729 = vmul.f32 %v267, %v470
      %v730 = vmul.f32 %v268, %v475
      %v731 = vmul.f32 %v269, %v475
      %v732 = vmul.f32 %v270, %v480
      %v733 = vmul.f32 %v271, %v480
      %v734 = vmul.f32 %v272, %v485
      %v735 = vmul.f32 %v273, %v485
      %v736 = vmul.f32 %v274, %v490
      %v737 = vmul.f32 %v275, %v490
      %v738 = vmul.f32 %v276, %v495
      %v739 = vmul.f32 %v277, %v495
      %v740 = vmul.f32 %v278, %v500
      %v741 = vmul.f32 %v279, %v500
      %v742 = vmul.f32 %v280, %v505
      %v743 = vmul.f32 %v281, %v505
      %v744 = vmul.f32 %v282, %v510
      %v745 = vmul.f32 %v283, %v510
      %v746 = vmul.f32 %v284, %v515
      %v747 = vmul.f32 %v285, %v515
      %v748 = vmul.f32 %v286, %v520
      %v749 = vmul.f32 %v287, %v520
      %v750 = vmul.f32 %v288, %v525
      %v751 = vmul.f32 %v289, %v525
      %v752 = vmul.f32 %v290, %v530
      %v753 = vmul.f32 %v291, %v530
      %v754 = vmul.f32 %v292, %v535
      %v755 = vmul.f32 %v293, %v535
      %v756 = vmul.f32 %v294, %v540
      %v757 = vmul.f32 %v295, %v540
      %v758 = vmul.f32 %v296, %v545
      %v759 = vmul.f32 %v297, %v545
      %v760 = vmul.f32 %v298, %v550
      %v761 = vmul.f32 %v299, %v550
      %v762 = vmul.f32 %v300, %v555
      %v763 = vmul.f32 %v301, %v555
      %v764 = vmul.f32 %v302, %v560
      %v765 = vmul.f32 %v303, %v560
      %v766 = vmul.f32 %v304, %v565
      %v767 = vmul.f32 %v305, %v565
      %v768 = vmul.f32 %v306, %v570
      %v769 = vmul.f32 %v307, %v570
      %v770 = vmul.f32 %v308, %v575
      %v771 = vmul.f32 %v309, %v575
      %v772 = vmul.f32 %v310, %v580
      %v773 = vmul.f32 %v311, %v580
      %v774 = vmul.f32 %v312, %v585
      %v775 = vmul.f32 %v313, %v585
      %v776 = vmul.f32 %v314, %v590
      %v777 = vmul.f32 %v315, %v590
      %v778 = vmul.f32 %v316, %v595
      %v779 = vmul.f32 %v317, %v595
      %v780 = vmul.f32 %v318, %v600
      %v781 = vmul.f32 %v319, %v600
      %v782 = vmul.f32 %v320, %v605
      %v783 = vmul.f32 %v321, %v605
      %v784 = vmul.f32 %v322, %v610
      %v785 = vmul.f32 %v323, %v610
      %v786 = vmul.f32 %v324, %v615
      %v787 = vmul.f32 %v325, %v615
      %v788 = vmul.f32 %v326, %v620
      %v789 = vmul.f32 %v327, %v620
      %v790 = vmul.f32 %v328, %v625
      %v791 = vmul.f32 %v329, %v625
      %v792 = vmul.f32 %v330, %v630
      %v793 = vmul.f32 %v331, %v630
      %v794 = vmul.f32 %v332, %v635
      %v795 = vmul.f32 %v333, %v635
      %v796 = vmul.f32 %v334, %v640
      %v797 = vmul.f32 %v335, %v640
      %v798 = vmul.f32 %v336, %v645
      %v799 = vmul.f32 %v337, %v645
      %v800 = vmul.f32 %v338, %v650
      %v801 = vmul.f32 %v339, %v650
      %v802 = vmul.f32 %v340, %v655
      %v803 = vmul.f32 %v341, %v655
      %v804 = vmul.f32 %v342, %v660
      %v805 = vmul.f32 %v343, %v660
      %v806 = vmul.f32 %v344, %v665
      %v807 = vmul.f32 %v345, %v665
      %v808 = vmul.f32 %v346, %v670
      %v809 = vmul.f32 %v347, %v670
      %v810 = vmul.f32 %v348, %v675
      %v811 = vmul.f32 %v349, %v675
      %v812 = vmul.f32 %v350, %v680
      %v813 = vmul.f32 %v351, %v680
      %814 = vst [vmem:[%s150] sm:$0xff] %v682
      %vm815 = vcmask 556032
      %816 = vst.msk [vmem:[%s150 + $0x8] sm:$0xff] %vm815, %v683
      %817 = vst [vmem:[%s150 + $0x10] sm:$0xff] %v684
      %818 = vst.msk [vmem:[%s150 + $0x18] sm:$0xff] %vm815, %v685
      %819 = vst [vmem:[%s150 + $0x20] sm:$0xff] %v686
      %820 = vst.msk [vmem:[%s150 + $0x28] sm:$0xff] %vm815, %v687
      %821 = vst [vmem:[%s150 + $0x30] sm:$0xff] %v688
      %822 = vst.msk [vmem:[%s150 + $0x38] sm:$0xff] %vm815, %v689
      %823 = vst [vmem:[%s150 + $0x40] sm:$0xff] %v690
      %824 = vst.msk [vmem:[%s150 + $0x48] sm:$0xff] %vm815, %v691
      %825 = vst [vmem:[%s150 + $0x50] sm:$0xff] %v692
      %826 = vst.msk [vmem:[%s150 + $0x58] sm:$0xff] %vm815, %v693
      %827 = vst [vmem:[%s150 + $0x60] sm:$0xff] %v694
      %828 = vst.msk [vmem:[%s150 + $0x68] sm:$0xff] %vm815, %v695
      %829 = vst [vmem:[%s150 + $0x70] sm:$0xff] %v696
      %830 = vst.msk [vmem:[%s150 + $0x78] sm:$0xff] %vm815, %v697
      %831 = vst [vmem:[%s150 + $0x80] sm:$0xff] %v698
      %832 = vst.msk [vmem:[%s150 + $0x88] sm:$0xff] %vm815, %v699
      %833 = vst [vmem:[%s150 + $0x90] sm:$0xff] %v700
      %834 = vst.msk [vmem:[%s150 + $0x98] sm:$0xff] %vm815, %v701
      %835 = vst [vmem:[%s150 + $0xa0] sm:$0xff] %v702
      %836 = vst.msk [vmem:[%s150 + $0xa8] sm:$0xff] %vm815, %v703
      %837 = vst [vmem:[%s150 + $0xb0] sm:$0xff] %v704
      %838 = vst.msk [vmem:[%s150 + $0xb8] sm:$0xff] %vm815, %v705
      %839 = vst [vmem:[%s150 + $0xc0] sm:$0xff] %v706
      %840 = vst.msk [vmem:[%s150 + $0xc8] sm:$0xff] %vm815, %v707
      %841 = vst [vmem:[%s150 + $0xd0] sm:$0xff] %v708
      %842 = vst.msk [vmem:[%s150 + $0xd8] sm:$0xff] %vm815, %v709
      %843 = vst [vmem:[%s150 + $0xe0] sm:$0xff] %v710
      %844 = vst.msk [vmem:[%s150 + $0xe8] sm:$0xff] %vm815, %v711
      %845 = vst [vmem:[%s150 + $0xf0] sm:$0xff] %v712
      %846 = vst.msk [vmem:[%s150 + $0xf8] sm:$0xff] %vm815, %v713
      %847 = vst [vmem:[%s150 + $0x100] sm:$0xff] %v714
      %848 = vst.msk [vmem:[%s150 + $0x108] sm:$0xff] %vm815, %v715
      %849 = vst [vmem:[%s150 + $0x110] sm:$0xff] %v716
      %850 = vst.msk [vmem:[%s150 + $0x118] sm:$0xff] %vm815, %v717
      %851 = vst [vmem:[%s150 + $0x120] sm:$0xff] %v718
      %852 = vst.msk [vmem:[%s150 + $0x128] sm:$0xff] %vm815, %v719
      %853 = vst [vmem:[%s150 + $0x130] sm:$0xff] %v720
      %854 = vst.msk [vmem:[%s150 + $0x138] sm:$0xff] %vm815, %v721
      %855 = vst [vmem:[%s150 + $0x140] sm:$0xff] %v722
      %856 = vst.msk [vmem:[%s150 + $0x148] sm:$0xff] %vm815, %v723
      %857 = vst [vmem:[%s150 + $0x150] sm:$0xff] %v724
      %858 = vst.msk [vmem:[%s150 + $0x158] sm:$0xff] %vm815, %v725
      %859 = vst [vmem:[%s150 + $0x160] sm:$0xff] %v726
      %860 = vst.msk [vmem:[%s150 + $0x168] sm:$0xff] %vm815, %v727
      %861 = vst [vmem:[%s150 + $0x170] sm:$0xff] %v728
      %862 = vst.msk [vmem:[%s150 + $0x178] sm:$0xff] %vm815, %v729
      %863 = vst [vmem:[%s150 + $0x180] sm:$0xff] %v730
      %864 = vst.msk [vmem:[%s150 + $0x188] sm:$0xff] %vm815, %v731
      %865 = vst [vmem:[%s150 + $0x190] sm:$0xff] %v732
      %866 = vst.msk [vmem:[%s150 + $0x198] sm:$0xff] %vm815, %v733
      %867 = vst [vmem:[%s150 + $0x1a0] sm:$0xff] %v734
      %868 = vst.msk [vmem:[%s150 + $0x1a8] sm:$0xff] %vm815, %v735
      %869 = vst [vmem:[%s150 + $0x1b0] sm:$0xff] %v736
      %870 = vst.msk [vmem:[%s150 + $0x1b8] sm:$0xff] %vm815, %v737
      %871 = vst [vmem:[%s150 + $0x1c0] sm:$0xff] %v738
      %872 = vst.msk [vmem:[%s150 + $0x1c8] sm:$0xff] %vm815, %v739
      %873 = vst [vmem:[%s150 + $0x1d0] sm:$0xff] %v740
      %874 = vst.msk [vmem:[%s150 + $0x1d8] sm:$0xff] %vm815, %v741
      %875 = vst [vmem:[%s150 + $0x1e0] sm:$0xff] %v742
      %876 = vst.msk [vmem:[%s150 + $0x1e8] sm:$0xff] %vm815, %v743
      %877 = vst [vmem:[%s150 + $0x1f0] sm:$0xff] %v744
      %878 = vst.msk [vmem:[%s150 + $0x1f8] sm:$0xff] %vm815, %v745
      %879 = vst [vmem:[%s150 + $0x200] sm:$0xff] %v746
      %880 = vst.msk [vmem:[%s150 + $0x208] sm:$0xff] %vm815, %v747
      %881 = vst [vmem:[%s150 + $0x210] sm:$0xff] %v748
      %882 = vst.msk [vmem:[%s150 + $0x218] sm:$0xff] %vm815, %v749
      %883 = vst [vmem:[%s150 + $0x220] sm:$0xff] %v750
      %884 = vst.msk [vmem:[%s150 + $0x228] sm:$0xff] %vm815, %v751
      %885 = vst [vmem:[%s150 + $0x230] sm:$0xff] %v752
      %886 = vst.msk [vmem:[%s150 + $0x238] sm:$0xff] %vm815, %v753
      %887 = vst [vmem:[%s150 + $0x240] sm:$0xff] %v754
      %888 = vst.msk [vmem:[%s150 + $0x248] sm:$0xff] %vm815, %v755
      %889 = vst [vmem:[%s150 + $0x250] sm:$0xff] %v756
      %890 = vst.msk [vmem:[%s150 + $0x258] sm:$0xff] %vm815, %v757
      %891 = vst [vmem:[%s150 + $0x260] sm:$0xff] %v758
      %892 = vst.msk [vmem:[%s150 + $0x268] sm:$0xff] %vm815, %v759
      %893 = vst [vmem:[%s150 + $0x270] sm:$0xff] %v760
      %894 = vst.msk [vmem:[%s150 + $0x278] sm:$0xff] %vm815, %v761
      %895 = vst [vmem:[%s150 + $0x280] sm:$0xff] %v762
      %896 = vst.msk [vmem:[%s150 + $0x288] sm:$0xff] %vm815, %v763
      %897 = vst [vmem:[%s150 + $0x290] sm:$0xff] %v764
      %898 = vst.msk [vmem:[%s150 + $0x298] sm:$0xff] %vm815, %v765
      %899 = vst [vmem:[%s150 + $0x2a0] sm:$0xff] %v766
      %900 = vst.msk [vmem:[%s150 + $0x2a8] sm:$0xff] %vm815, %v767
      %901 = vst [vmem:[%s150 + $0x2b0] sm:$0xff] %v768
      %902 = vst.msk [vmem:[%s150 + $0x2b8] sm:$0xff] %vm815, %v769
      %903 = vst [vmem:[%s150 + $0x2c0] sm:$0xff] %v770
      %904 = vst.msk [vmem:[%s150 + $0x2c8] sm:$0xff] %vm815, %v771
      %905 = vst [vmem:[%s150 + $0x2d0] sm:$0xff] %v772
      %906 = vst.msk [vmem:[%s150 + $0x2d8] sm:$0xff] %vm815, %v773
      %907 = vst [vmem:[%s150 + $0x2e0] sm:$0xff] %v774
      %908 = vst.msk [vmem:[%s150 + $0x2e8] sm:$0xff] %vm815, %v775
      %909 = vst [vmem:[%s150 + $0x2f0] sm:$0xff] %v776
      %910 = vst.msk [vmem:[%s150 + $0x2f8] sm:$0xff] %vm815, %v777
      %911 = vst [vmem:[%s150 + $0x300] sm:$0xff] %v778
      %912 = vst.msk [vmem:[%s150 + $0x308] sm:$0xff] %vm815, %v779
      %913 = vst [vmem:[%s150 + $0x310] sm:$0xff] %v780
      %914 = vst.msk [vmem:[%s150 + $0x318] sm:$0xff] %vm815, %v781
      %915 = vst [vmem:[%s150 + $0x320] sm:$0xff] %v782
      %916 = vst.msk [vmem:[%s150 + $0x328] sm:$0xff] %vm815, %v783
      %917 = vst [vmem:[%s150 + $0x330] sm:$0xff] %v784
      %918 = vst.msk [vmem:[%s150 + $0x338] sm:$0xff] %vm815, %v785
      %919 = vst [vmem:[%s150 + $0x340] sm:$0xff] %v786
      %920 = vst.msk [vmem:[%s150 + $0x348] sm:$0xff] %vm815, %v787
      %921 = vst [vmem:[%s150 + $0x350] sm:$0xff] %v788
      %922 = vst.msk [vmem:[%s150 + $0x358] sm:$0xff] %vm815, %v789
      %923 = vst [vmem:[%s150 + $0x360] sm:$0xff] %v790
      %924 = vst.msk [vmem:[%s150 + $0x368] sm:$0xff] %vm815, %v791
      %925 = vst [vmem:[%s150 + $0x370] sm:$0xff] %v792
      %926 = vst.msk [vmem:[%s150 + $0x378] sm:$0xff] %vm815, %v793
      %927 = vst [vmem:[%s150 + $0x380] sm:$0xff] %v794
      %928 = vst.msk [vmem:[%s150 + $0x388] sm:$0xff] %vm815, %v795
      %929 = vst [vmem:[%s150 + $0x390] sm:$0xff] %v796
      %930 = vst.msk [vmem:[%s150 + $0x398] sm:$0xff] %vm815, %v797
      %931 = vst [vmem:[%s150 + $0x3a0] sm:$0xff] %v798
      %932 = vst.msk [vmem:[%s150 + $0x3a8] sm:$0xff] %vm815, %v799
      %933 = vst [vmem:[%s150 + $0x3b0] sm:$0xff] %v800
      %934 = vst.msk [vmem:[%s150 + $0x3b8] sm:$0xff] %vm815, %v801
      %935 = vst [vmem:[%s150 + $0x3c0] sm:$0xff] %v802
      %936 = vst.msk [vmem:[%s150 + $0x3c8] sm:$0xff] %vm815, %v803
      %937 = vst [vmem:[%s150 + $0x3d0] sm:$0xff] %v804
      %938 = vst.msk [vmem:[%s150 + $0x3d8] sm:$0xff] %vm815, %v805
      %939 = vst [vmem:[%s150 + $0x3e0] sm:$0xff] %v806
      %940 = vst.msk [vmem:[%s150 + $0x3e8] sm:$0xff] %vm815, %v807
      %941 = vst [vmem:[%s150 + $0x3f0] sm:$0xff] %v808
      %942 = vst.msk [vmem:[%s150 + $0x3f8] sm:$0xff] %vm815, %v809
      %943 = vst [vmem:[%s150 + $0x400] sm:$0xff] %v810
      %944 = vst.msk [vmem:[%s150 + $0x408] sm:$0xff] %vm815, %v811
      %945 = vst [vmem:[%s150 + $0x410] sm:$0xff] %v812
      %946 = vst.msk [vmem:[%s150 + $0x418] sm:$0xff] %vm815, %v813
      %s947 = smul.u32 66, %s13
      %p948 = scmp.lt.s32.totalorder %s947, 131
      %s949 = scalar_select %p948, %s947, 131
      %s950 = smul.addr %s949, 2
      %s951 = smul.addr %s950, 8
      %s952 = scalar_lea.vmem %s2, %s951
      // Predicated region
      $region29: #{tpu_custom_call.1} parent=27 // pred_check
        %p953 = pneg %p78
      $region30: #{tpu_custom_call.1} parent=27 // pred_check_branch
        %955 = sbr.rel (%p953) target = $region32
      $region31: #{tpu_custom_call.1} parent=27 // pred_region
        %s956 = smul.u32 66, %s13
      $region32: #{tpu_custom_call.1} parent=27 // pred_fallthru
        _
    $region28: #{tpu_custom_call.1} parent=5 // pred_fallthru
      _
    %p957 = scmp.le.s32.totalorder 2, %s8
    // Predicated region
    $region33: #{tpu_custom_call.1} parent=5 // pred_check
      %p958 = pneg %p957
    $region34: #{tpu_custom_call.1} parent=5 // pred_check_branch
      %960 = sbr.rel (%p958) target = $region36
    $region35: #{tpu_custom_call.1} parent=5 // pred_region
      %s961 = ssub.s32 %s8, 2
      // Predicated region
      $region37: #{tpu_custom_call.1} parent=35 // pred_check
        %p962 = pneg %p84
      $region38: #{tpu_custom_call.1} parent=35 // pred_check_branch
        %964 = sbr.rel (%p962) target = $region40
      $region39: #{tpu_custom_call.1} parent=35 // pred_region
        %s965 = smul.u32 66, %s14
        %p966 = scmp.lt.s32.totalorder %s965, 131
        %s967 = scalar_select %p966, %s965, 131
        %s968 = smul.addr %s967, 2
        %s969 = smul.addr %s968, 8
        %s970 = scalar_lea.vmem %s2, %s969
      $region40: #{tpu_custom_call.1} parent=35 // pred_fallthru
        _
    $region36: #{tpu_custom_call.1} parent=5 // pred_fallthru
      _
  $region6: #{tpu_custom_call.1} parent=0 // loop_footer
    %s12 = sadd.s32 1, %s8
  $region7: #{tpu_custom_call.1} parent=0 // loop_footer_branch
    %7 = sbr.rel target = $region3
  $region8: #{tpu_custom_call.1} parent=0 // loop_exit
    _

</llo_original>
